<compile_context>
chip_gen: v6e
topology: v6e:2x2x1
jax: 0.10.0
libtpu: 0.0.40
codegen_flags: <defaults>
</compile_context>

<pallas_src>
import functools

import jax
import jax.numpy as jnp
from jax.experimental import pallas as pl
from jax.experimental.pallas import tpu as pltpu

_LANES = 128


def _dice_partial_kernel(p_ref, t_ref, pt_ref, lin_ref, *,
                         rows_valid, nbps, block_rows, needs_mask):
    """Accumulates per-lane partials of sum(p*t) and sum(p+t).

    Grid = (num_splits, blocks_per_split): axis 0 is "parallel" (megacore
    sharding on multi-TC chips), axis 1 is the "arbitrary" reduction axis.
    The (1, 8, 128) output blocks stay resident in VMEM across axis 1 and are
    accumulated into directly (no full-block scratch).
    """
    j = pl.program_id(1)

    @pl.when(j == 0)
    def _init():
        pt_ref[...] = jnp.zeros_like(pt_ref)
        lin_ref[...] = jnp.zeros_like(lin_ref)

    p = p_ref[...].astype(jnp.float32)
    t = t_ref[...].astype(jnp.float32)
    n8 = block_rows // 8

    def _accumulate(pv, tv):
        # Fold (block_rows, 128) down to (8, 128) with pure VPU vreg adds.
        pt = (pv * tv).reshape(n8, 8, _LANES).sum(axis=0)
        ln = (pv + tv).reshape(n8, 8, _LANES).sum(axis=0)
        pt_ref[...] += pt[None]
        lin_ref[...] += ln[None]

    if needs_mask:
        s = pl.program_id(0)
        # NOTE: int32 global row index; fine for < 2**31 rows (< 2**38 elems).
        row0 = (s * nbps + j) * block_rows          # UNclamped global row base
        interior = (row0 + block_rows) <= rows_valid

        @pl.when(interior)
        def _hot():
            _accumulate(p, t)

        @pl.when(jnp.logical_not(interior))
        def _boundary():
            # Ragged last block and the (clamped) overflow block: mask the
            # inputs themselves so stale VMEM padding (even NaNs) can't leak.
            row_ids = row0 + jax.lax.broadcasted_iota(
                jnp.int32, (block_rows, _LANES), 0)
            mask = row_ids < rows_valid
            _accumulate(jnp.where(mask, p, 0.0), jnp.where(mask, t, 0.0))
    else:
        _accumulate(p, t)


def _tpu_params():
    """(vmem_capacity_bytes, tensorcores_per_chip) with safe fallbacks."""
    vmem_cap = 64 << 20          # conservative default (v7x-sized)
    try:
        info = pltpu.get_tpu_info()
        vmem_cap = int(getattr(info, "vmem_capacity_bytes", vmem_cap))
    except Exception:
        pass
    num_tc = 1
    try:
        kind = jax.devices()[0].device_kind.lower()
        if ("v4" in kind) or ("v5p" in kind) or ("v7" in kind):
            num_tc = 2           # megacore / dual-TensorCore chips
    except Exception:
        pass
    return vmem_cap, num_tc


def binary_dice_loss(predict, target, smooth=1.0, p=2, reduction="mean",
                     block_rows=None):
    """Pallas implementation of BinaryDiceLoss.forward.

    predict, target: arrays of identical shape [N, *]. Returns a scalar f32.
    """
    assert predict.shape[0] == target.shape[0], \
        "predict & target batch size don't match"
    assert predict.shape == target.shape
    del p  # unused by the reference forward (matches the PyTorch code)

    total = 1
    for d in predict.shape:
        total *= int(d)

    flat_p = predict.reshape(-1)
    flat_t = target.reshape(-1)

    rows = total // _LANES
    tail_len = total - rows * _LANES

    s_pt = jnp.float32(0.0)    # sum(predict * target)
    s_lin = jnp.float32(0.0)   # sum(predict) + sum(target)

    if rows >= 8:
        bulk = rows * _LANES
        if tail_len:
            # TODO(synk): for lane-ragged totals this prefix slice materializes
            # a copy of both operands; a copy-free path needs a manual-DMA
            # (memory_space=pl.ANY) variant over the unsliced flat arrays.
            p2 = flat_p[:bulk].reshape(rows, _LANES)
            t2 = flat_t[:bulk].reshape(rows, _LANES)
        else:
            p2 = flat_p.reshape(rows, _LANES)       # pure bitcast, no copy
            t2 = flat_t.reshape(rows, _LANES)

        itemsize = int(jnp.dtype(predict.dtype).itemsize)
        sub = max(8, 32 // itemsize)                # 8 f32 / 16 bf16 / 32 int8
        vmem_cap, num_tc = _tpu_params()

        # ~8 MiB input blocks on 128-MiB-VMEM chips, ~4 MiB on 64-MiB v7x.
        max_block_bytes = (8 << 20) if vmem_cap >= (96 << 20) else (4 << 20)
        max_block_bytes = min(max_block_bytes, max(1 << 20, vmem_cap // 16))
        target_rows = max(sub, max_block_bytes // (_LANES * itemsize))

        blk_req = target_rows if block_rows is None else min(int(block_rows),
                                                             target_rows)
        blk_rows = min(blk_req, rows)
        sub_eff = sub if blk_rows >= sub else 8
        blk_rows = max(8, (blk_rows // sub_eff) * sub_eff)

        nb = int(pl.cdiv(rows, blk_rows))

        # Megacore split only on multi-TensorCore chips (v4 / v5p / v7x).
        num_splits = 2 if (num_tc >= 2 and nb >= 2) else 1
        nbps = int(pl.cdiv(nb, num_splits))
        overflow = (num_splits * nbps) != nb
        needs_mask = overflow or (rows % blk_rows != 0)

        if overflow:
            # Clamp the DMA block index; the overflow block is fully masked
            # in-kernel so its (redundant) data contributes zero.
            def in_map(s, j):
                return (jnp.minimum(s * nbps + j, nb - 1), 0)
        else:
            def in_map(s, j):
                return (s * nbps + j, 0)

        # VMEM budget: 2 inputs x 2 buffers x block (native dtype) + headroom.
        in_block_bytes = blk_rows * _LANES * itemsize
        vmem_limit = int(max(4 * in_block_bytes + (8 << 20), 16 << 20))

        kernel = functools.partial(
            _dice_partial_kernel,
            rows_valid=rows, nbps=nbps, block_rows=blk_rows,
            needs_mask=needs_mask)

        out_map = lambda s, j: (s, 0, 0)
        pt_parts, lin_parts = pl.pallas_call(
            kernel,
            out_shape=(
                jax.ShapeDtypeStruct((num_splits, 8, _LANES), jnp.float32),
                jax.ShapeDtypeStruct((num_splits, 8, _LANES), jnp.float32),
            ),
            grid_spec=pltpu.PrefetchScalarGridSpec(
                num_scalar_prefetch=0,
                grid=(num_splits, nbps),
                in_specs=[
                    pl.BlockSpec((blk_rows, _LANES), in_map),
                    pl.BlockSpec((blk_rows, _LANES), in_map),
                ],
                out_specs=[
                    pl.BlockSpec((1, 8, _LANES), out_map),
                    pl.BlockSpec((1, 8, _LANES), out_map),
                ],
            ),
            compiler_params=pltpu.CompilerParams(
                dimension_semantics=("parallel", "arbitrary"),
                vmem_limit_bytes=vmem_limit),
        )(p2, t2)

        s_pt = s_pt + jnp.sum(pt_parts)
        s_lin = s_lin + jnp.sum(lin_parts)

        if tail_len:
            # < 128 leftover elements: negligible, handled with plain jnp.
            tp = flat_p[bulk:].astype(jnp.float32)
            tt = flat_t[bulk:].astype(jnp.float32)
            s_pt = s_pt + jnp.sum(tp * tt)
            s_lin = s_lin + jnp.sum(tp) + jnp.sum(tt)
    else:
        # < 1024 elements total: not worth a kernel launch.
        tp = flat_p.astype(jnp.float32)
        tt = flat_t.astype(jnp.float32)
        s_pt = jnp.sum(tp * tt)
        s_lin = jnp.sum(tp) + jnp.sum(tt)

    num = 2.0 * s_pt + jnp.float32(smooth)
    den = s_lin + jnp.float32(smooth)
    loss = jnp.float32(1.0) - num / den

    # The reference loss is a scalar, so 'mean'/'sum'/'none' are identical.
    if reduction in ("mean", "sum", "none"):
        return loss
    raise Exception("Unexpected reduction {}".format(reduction))


def _reference(predict, target, smooth=1.0):
    n = predict.shape[0]
    p2 = predict.reshape(n, -1).astype(jnp.float32)
    t2 = target.reshape(n, -1).astype(jnp.float32)
    num = 2.0 * jnp.sum(p2 * t2) + smooth
    den = jnp.sum(p2) + jnp.sum(t2) + smooth
    return 1.0 - num / den


if __name__ == "__main__":
    key = jax.random.PRNGKey(0)
    k1, k2 = jax.random.split(key)

    # Primary check: small shape implied by the module (N=2, C=4, 16x16).
    predict = jax.nn.sigmoid(jax.random.normal(k1, (2, 4, 16, 16), jnp.float32))
    target = (jax.random.uniform(k2, (2, 4, 16, 16)) > 0.5).astype(jnp.float32)

    loss = binary_dice_loss(predict, target, smooth=1.0, p=2, reduction="mean")
    loss = jax.block_until_ready(loss)
    ref = _reference(predict, target, smooth=1.0)
    assert jnp.allclose(loss, ref, rtol=1e-5, atol=1e-6), (loss, ref)

    # Secondary check: bf16 inputs, non-aligned total size — exercises the
    # native-dtype path, multi-block accumulation, the predicated boundary
    # mask (and, on multi-TC chips, the split with a clamped overflow block)
    # plus the jnp tail.
    k3, k4 = jax.random.split(k2)
    pred2 = jax.nn.sigmoid(
        jax.random.normal(k3, (3, 5, 17, 19), jnp.float32)).astype(jnp.bfloat16)
    targ2 = (jax.random.uniform(k4, (3, 5, 17, 19)) > 0.5).astype(jnp.bfloat16)
    loss2 = binary_dice_loss(pred2, targ2, smooth=1.0, p=2, reduction="none",
                             block_rows=16)
    loss2 = jax.block_until_ready(loss2)
    ref2 = _reference(pred2, targ2, smooth=1.0)
    assert jnp.allclose(loss2, ref2, rtol=1e-4, atol=1e-5), (loss2, ref2)

    print("KERNEL_OK")
</pallas_src>

<mosaic_0001>
module attributes {stable_mosaic.version = 11 : i64} {
  func.func @_dice_partial_kernel(%arg0: i32, %arg1: i32, %arg2: memref<16x128xf32, #tpu.memory_space<vmem>>, %arg3: memref<16x128xf32, #tpu.memory_space<vmem>>, %arg4: memref<1x8x128xf32, #tpu.memory_space<vmem>>, %arg5: memref<1x8x128xf32, #tpu.memory_space<vmem>>) attributes {dimension_semantics = [#tpu.dimension_semantics<parallel>, #tpu.dimension_semantics<arbitrary>], iteration_bounds = array<i64: 1, 1>, scalar_prefetch = 0 : i64, scratch_operands = 0 : i64, tpu.core_type = #tpu.core_type<tc>, window_params = [{transform_indices = @transform_0, window_bounds = array<i64: 16, 128>}, {transform_indices = @transform_1, window_bounds = array<i64: 16, 128>}, {transform_indices = @transform_2, window_bounds = array<i64: 1, 8, 128>}, {transform_indices = @transform_3, window_bounds = array<i64: 1, 8, 128>}]} {
    %c0_i32 = arith.constant 0 : i32
    %0 = arith.cmpi eq, %arg1, %c0_i32 : i32
    %1 = arith.extui %0 : i1 to i32
    %c0_i32_0 = arith.constant 0 : i32
    %2 = arith.cmpi ne, %1, %c0_i32_0 : i32
    scf.if %2 {
      %cst_17 = arith.constant 0.000000e+00 : f32
      %19 = vector.broadcast %cst_17 : f32 to vector<1x8x128xf32>
      %c0_18 = arith.constant 0 : index
      %c0_19 = arith.constant 0 : index
      %c0_20 = arith.constant 0 : index
      %20 = vector.load %arg4[%c0_18, %c0_19, %c0_20] : memref<1x8x128xf32, #tpu.memory_space<vmem>>, vector<1x8x128xf32>
      tpu.vector_store %arg4[%c0_18, %c0_19, %c0_20], %19 {strides = array<i32>} : memref<1x8x128xf32, #tpu.memory_space<vmem>>, vector<1x8x128xf32>,
      %cst_21 = arith.constant 0.000000e+00 : f32
      %21 = vector.broadcast %cst_21 : f32 to vector<1x8x128xf32>
      %c0_22 = arith.constant 0 : index
      %c0_23 = arith.constant 0 : index
      %c0_24 = arith.constant 0 : index
      %22 = vector.load %arg5[%c0_22, %c0_23, %c0_24] : memref<1x8x128xf32, #tpu.memory_space<vmem>>, vector<1x8x128xf32>
      tpu.vector_store %arg5[%c0_22, %c0_23, %c0_24], %21 {strides = array<i32>} : memref<1x8x128xf32, #tpu.memory_space<vmem>>, vector<1x8x128xf32>,
    } else {
    }
    %c0 = arith.constant 0 : index
    %c0_1 = arith.constant 0 : index
    %3 = vector.load %arg2[%c0, %c0_1] : memref<16x128xf32, #tpu.memory_space<vmem>>, vector<16x128xf32>
    %c0_2 = arith.constant 0 : index
    %c0_3 = arith.constant 0 : index
    %4 = vector.load %arg3[%c0_2, %c0_3] : memref<16x128xf32, #tpu.memory_space<vmem>>, vector<16x128xf32>
    %5 = arith.mulf %3, %4 : vector<16x128xf32>
    %6 = vector.shape_cast %5 : vector<16x128xf32> to vector<2x8x128xf32>
    %cst = arith.constant dense<0.000000e+00> : vector<8x128xf32>
    %7 = vector.multi_reduction <add>, %6, %cst [0] : vector<2x8x128xf32> to vector<8x128xf32>
    %8 = arith.addf %3, %4 : vector<16x128xf32>
    %9 = vector.shape_cast %8 : vector<16x128xf32> to vector<2x8x128xf32>
    %cst_4 = arith.constant dense<0.000000e+00> : vector<8x128xf32>
    %10 = vector.multi_reduction <add>, %9, %cst_4 [0] : vector<2x8x128xf32> to vector<8x128xf32>
    %c0_5 = arith.constant 0 : index
    %c0_6 = arith.constant 0 : index
    %c0_7 = arith.constant 0 : index
    %11 = vector.load %arg4[%c0_5, %c0_6, %c0_7] : memref<1x8x128xf32, #tpu.memory_space<vmem>>, vector<1x8x128xf32>
    %12 = vector.shape_cast %7 : vector<8x128xf32> to vector<1x8x128xf32>
    %13 = arith.addf %11, %12 : vector<1x8x128xf32>
    %c0_8 = arith.constant 0 : index
    %c0_9 = arith.constant 0 : index
    %c0_10 = arith.constant 0 : index
    %14 = vector.load %arg4[%c0_8, %c0_9, %c0_10] : memref<1x8x128xf32, #tpu.memory_space<vmem>>, vector<1x8x128xf32>
    tpu.vector_store %arg4[%c0_8, %c0_9, %c0_10], %13 {strides = array<i32>} : memref<1x8x128xf32, #tpu.memory_space<vmem>>, vector<1x8x128xf32>,
    %c0_11 = arith.constant 0 : index
    %c0_12 = arith.constant 0 : index
    %c0_13 = arith.constant 0 : index
    %15 = vector.load %arg5[%c0_11, %c0_12, %c0_13] : memref<1x8x128xf32, #tpu.memory_space<vmem>>, vector<1x8x128xf32>
    %16 = vector.shape_cast %10 : vector<8x128xf32> to vector<1x8x128xf32>
    %17 = arith.addf %15, %16 : vector<1x8x128xf32>
    %c0_14 = arith.constant 0 : index
    %c0_15 = arith.constant 0 : index
    %c0_16 = arith.constant 0 : index
    %18 = vector.load %arg5[%c0_14, %c0_15, %c0_16] : memref<1x8x128xf32, #tpu.memory_space<vmem>>, vector<1x8x128xf32>
    tpu.vector_store %arg5[%c0_14, %c0_15, %c0_16], %17 {strides = array<i32>} : memref<1x8x128xf32, #tpu.memory_space<vmem>>, vector<1x8x128xf32>,
    return
  }
  func.func @transform_0(%arg0: i32, %arg1: i32) -> (i32, i32) {
    %c1_i32 = arith.constant 1 : i32
    %0 = arith.muli %arg0, %c1_i32 : i32
    %1 = arith.addi %0, %arg1 : i32
    %c0_i32 = arith.constant 0 : i32
    %c0_i32_0 = arith.constant 0 : i32
    return %1, %c0_i32 : i32, i32
  }
  func.func @transform_1(%arg0: i32, %arg1: i32) -> (i32, i32) {
    %c1_i32 = arith.constant 1 : i32
    %0 = arith.muli %arg0, %c1_i32 : i32
    %1 = arith.addi %0, %arg1 : i32
    %c0_i32 = arith.constant 0 : i32
    %c0_i32_0 = arith.constant 0 : i32
    return %1, %c0_i32 : i32, i32
  }
  func.func @transform_2(%arg0: i32, %arg1: i32) -> (i32, i32, i32) {
    %c0_i32 = arith.constant 0 : i32
    %c0_i32_0 = arith.constant 0 : i32
    %c0_i32_1 = arith.constant 0 : i32
    return %arg0, %c0_i32, %c0_i32_0 : i32, i32, i32
  }
  func.func @transform_3(%arg0: i32, %arg1: i32) -> (i32, i32, i32) {
    %c0_i32 = arith.constant 0 : i32
    %c0_i32_0 = arith.constant 0 : i32
    %c0_i32_1 = arith.constant 0 : i32
    return %arg0, %c0_i32, %c0_i32_0 : i32, i32, i32
  }
}

</mosaic_0001>

<llo_original>
// kernel: tpu_custom_call.1
$region0: #{tpu_custom_call.1}
  #allocation0 [shape = 'u32[]', space=smem, size = 0x4, offset = 0x4, fixed_abs, tag = 'smem constant byte address 0x4 - core index']
  #allocation1 [shape = 'u32[144,128]{1,0:T(1,128)}', space=vmem, size = 0x12000, scoped, tag = 'internal scratch']
  %s0 = inlined_call_operand.hbm [shape: f32[16,128], index: 0, kind: input, shape index: {}]
  %s1 = inlined_call_operand.hbm [shape: f32[16,128], index: 1, kind: input, shape index: {}]
  %s2 = inlined_call_operand.hbm [shape: f32[1,8,128], index: 2, kind: output, shape index: {0}]
  %s3 = inlined_call_operand.hbm [shape: f32[1,8,128], index: 3, kind: output, shape index: {1}]
  %4 = xla_tuple %s2, %s3
  %s5 = sld [smem:[#allocation0]]
  $region38: #{tpu_custom_call.1} parent=0
    _
  %s7 = ssub.s32 1, %s5
  %s8 = scalar_select 0, %s7, %s5
  $region1: #{tpu_custom_call.1} parent=0
    #allocation2 [shape = 'u8[8192]{0}', space=vmem, size = 0x2000, scoped, tag = 'input window, operand 0, single buffered']
    #allocation3 [shape = 's32[1]{0}', space=sflag, size = 0x4, scoped, tag = 'scoped memory for tpu_custom_call.1']
    #allocation4 [shape = 's32[1]{0}', space=sflag, size = 0x4, scoped, tag = 'scoped memory for tpu_custom_call.1']
    #allocation5 [shape = 'u8[8192]{0}', space=vmem, size = 0x2000, scoped, tag = 'input window, operand 1, single buffered']
    #allocation6 [shape = 's32[1]{0}', space=sflag, size = 0x4, scoped, tag = 'scoped memory for tpu_custom_call.1']
    #allocation7 [shape = 'u8[4096]{0}', space=vmem, size = 0x1000, scoped, tag = 'output window, operand 0, single buffered']
    #allocation8 [shape = 'u8[4096]{0}', space=vmem, size = 0x1000, scoped, tag = 'output window, operand 1, single buffered']
    #allocation9 [shape = 's32[1]{0}', space=sflag, size = 0x4, scoped, tag = 'scoped memory for tpu_custom_call.1']
    %9 = vsyncpa [#allocation3], 0
    %10 = vsyncpa [#allocation6], 0
    %11 = vsyncpa [#allocation4], 0
    %12 = vsyncpa [#allocation9], 0
    // Predicated region
    $region2: #{tpu_custom_call.1} parent=1 // pred_check
      _
    $region3: #{tpu_custom_call.1} parent=1 // pred_check_branch
      %14 = sbr.rel (0) target = $region5
    $region4: #{tpu_custom_call.1} parent=1 // pred_region
      %s15 = sadd.s32 0, 0
      %s16 = smul.u32 2, %s15
      %s18 = ssub.s32 256, 256
      %19 = vsyncadd [#allocation3], %s18
      %s20 = smul.addr %s16, 128
      %s21 = scalar_lea.hbm %s0, %s20
      %s22 = sshll.u32 [#allocation2], 4
      %s23 = int_to_ptr.vmem [resolvable:$true] %s22
      %28 = dma.hbm_to_vmem [thread:$0]  %s21, 256, %s23, [#allocation3], 128, 128, 8
    $region5: #{tpu_custom_call.1} parent=1 // pred_fallthru
      _
    // Predicated region
    $region6: #{tpu_custom_call.1} parent=1 // pred_check
      _
    $region7: #{tpu_custom_call.1} parent=1 // pred_check_branch
      %30 = sbr.rel (0) target = $region9
    $region8: #{tpu_custom_call.1} parent=1 // pred_region
      %s31 = sadd.s32 0, 0
      %s32 = smul.u32 2, %s31
      %s34 = ssub.s32 256, 256
      %35 = vsyncadd [#allocation6], %s34
      %s36 = smul.addr %s32, 128
      %s37 = scalar_lea.hbm %s1, %s36
      %s38 = sshll.u32 [#allocation5], 4
      %s39 = int_to_ptr.vmem [resolvable:$true] %s38
      %44 = dma.hbm_to_vmem [thread:$0]  %s37, 256, %s39, [#allocation6], 128, 128, 8
    $region9: #{tpu_custom_call.1} parent=1 // pred_fallthru
      _
    // Predicated region
    $region10: #{tpu_custom_call.1} parent=1 // pred_check
      _
    $region11: #{tpu_custom_call.1} parent=1 // pred_check_branch
      %46 = sbr.rel (0) target = $region13
    $region12: #{tpu_custom_call.1} parent=1 // pred_region
      %47 = dma.done [#allocation3], 256
    $region13: #{tpu_custom_call.1} parent=1 // pred_fallthru
      _
    // Predicated region
    $region14: #{tpu_custom_call.1} parent=1 // pred_check
      _
    $region15: #{tpu_custom_call.1} parent=1 // pred_check_branch
      %49 = sbr.rel (0) target = $region17
    $region16: #{tpu_custom_call.1} parent=1 // pred_region
      %50 = dma.done [#allocation6], 256
    $region17: #{tpu_custom_call.1} parent=1 // pred_fallthru
      _
    %s51 = sadd.s32 0, 0
    %s52 = smul.u32 2, %s51
    %s53 = sadd.s32 0, 0
    %s54 = smul.u32 2, %s53
    %p55 = scmp.eq.s32.totalorder 0, 0
    // Predicated region
    $region18: #{tpu_custom_call.1} parent=1 // pred_check
      %p56 = pneg %p55
    $region19: #{tpu_custom_call.1} parent=1 // pred_check_branch
      %58 = sbr.rel (%p56) target = $region21
    $region20: #{tpu_custom_call.1} parent=1 // pred_region
      %59 = vst [vmem:[#allocation7] sm:$0xff] 0.0
      %60 = vst [vmem:[#allocation8] sm:$0xff] 0.0
    $region21: #{tpu_custom_call.1} parent=1 // pred_fallthru
      _
    %v61 = vld [vmem:[#allocation2] sm:$0xff]
    %v62 = vld [vmem:[#allocation2 + $0x8] sm:$0xff]
    %v63 = vld [vmem:[#allocation5] sm:$0xff]
    %v64 = vld [vmem:[#allocation5 + $0x8] sm:$0xff]
    %v65 = vmul.f32 %v61, %v63
    %v66 = vmul.f32 %v62, %v64
    %v67 = vadd.f32 %v65, %v66
    %v68 = vadd.f32 %v61, %v63
    %v69 = vadd.f32 %v62, %v64
    %v70 = vadd.f32 %v68, %v69
    %v71 = vld [vmem:[#allocation7] sm:$0xff]
    %v72 = vadd.f32 %v71, %v67
    %73 = vst [vmem:[#allocation7] sm:$0xff] %v72
    %v74 = vld [vmem:[#allocation8] sm:$0xff]
    %v75 = vadd.f32 %v74, %v70
    %76 = vst [vmem:[#allocation8] sm:$0xff] %v75
    // Predicated region
    $region22: #{tpu_custom_call.1} parent=1 // pred_check
      _
    $region23: #{tpu_custom_call.1} parent=1 // pred_check_branch
      %78 = sbr.rel (0) target = $region25
    $region24: #{tpu_custom_call.1} parent=1 // pred_region
      %s80 = ssub.s32 128, 128
      %81 = vsyncadd [#allocation4], %s80
      %s83 = sshll.u32 [#allocation7], 4
      %s84 = int_to_ptr.vmem [resolvable:$true] %s83
      %86 = dma.vmem_to_hbm [thread:$0]  %s84, 128, %s2, [#allocation4]
    $region25: #{tpu_custom_call.1} parent=1 // pred_fallthru
      _
    // Predicated region
    $region26: #{tpu_custom_call.1} parent=1 // pred_check
      _
    $region27: #{tpu_custom_call.1} parent=1 // pred_check_branch
      %88 = sbr.rel (0) target = $region29
    $region28: #{tpu_custom_call.1} parent=1 // pred_region
      %s90 = ssub.s32 128, 128
      %91 = vsyncadd [#allocation9], %s90
      %s93 = sshll.u32 [#allocation8], 4
      %s94 = int_to_ptr.vmem [resolvable:$true] %s93
      %96 = dma.vmem_to_hbm [thread:$0]  %s94, 128, %s3, [#allocation9]
    $region29: #{tpu_custom_call.1} parent=1 // pred_fallthru
      _
    // Predicated region
    $region30: #{tpu_custom_call.1} parent=1 // pred_check
      _
    $region31: #{tpu_custom_call.1} parent=1 // pred_check_branch
      %98 = sbr.rel (0) target = $region33
    $region32: #{tpu_custom_call.1} parent=1 // pred_region
      %99 = dma.done [#allocation4], 128
    $region33: #{tpu_custom_call.1} parent=1 // pred_fallthru
      _
    // Predicated region
    $region34: #{tpu_custom_call.1} parent=1 // pred_check
      _
    $region35: #{tpu_custom_call.1} parent=1 // pred_check_branch
      %101 = sbr.rel (0) target = $region37
    $region36: #{tpu_custom_call.1} parent=1 // pred_region
      %102 = dma.done [#allocation9], 128
    $region37: #{tpu_custom_call.1} parent=1 // pred_fallthru
      _
    %103 = vsyncpa [#allocation3], 1
    %104 = vsyncpa [#allocation6], 1
    %105 = vsyncpa [#allocation4], 1
    %106 = vsyncpa [#allocation9], 1

</llo_original>
